<compile_context>
chip_gen: v6e
topology: v6e:2x2x1
jax: 0.10.0
libtpu: 0.0.40
codegen_flags: <defaults>
</compile_context>

<pallas_src>
import jax
import jax.numpy as jnp
from jax.experimental import pallas as pl
from jax.experimental.pallas import tpu as pltpu


def _round_up(n, m):
    return ((n + m - 1) // m) * m


def _pad_lane(d):
    # Lane-dense multiple of 128; use 256-wide padding once the dim exceeds a
    # single 128 lane group so the 2x256^2 MXU on v6e/v7x is fully fed.
    return _round_up(d, 256) if d > 128 else _round_up(d, 128)


def _pick_batch_tile(B):
    """Return (tile_b, padded_B)."""
    if B <= 32:
        # One tile covering the whole batch; block dim == array dim, so no
        # batch padding and no wasted rows for small B.
        return B, B
    # Split into >= 2 grid steps (pipelining + both TensorCores on v7x),
    # capped at 512 rows to amortize the ~0.35us per-step overhead while
    # keeping the f32 hidden activation (tile_b x hid_p) bounded in VMEM.
    tile = min(512, _round_up(-(-B // 2), 8))
    return tile, _round_up(B, tile)


def _vmem_ceiling_bytes():
    try:
        cap = int(pltpu.get_tpu_info().vmem_capacity_bytes)
    except Exception:
        cap = 64 * 1024 * 1024  # conservative default: v7x per-core VMEM
    return (cap * 3) // 4       # leave headroom for compiler scratch/staging


def mlp_kernel(x_ref, w1_ref, b1_ref, w2_ref, b2_ref, o_ref):
    # fc1 on the MXU: cast x to the weight dtype (bf16 fast path on all
    # generations; no-op for f32), accumulate in f32.
    x = x_ref[...].astype(w1_ref.dtype)
    h = jnp.dot(x, w1_ref[...], preferred_element_type=jnp.float32)
    h = h + b1_ref[...]            # (1, hid_p) broadcasts over batch rows
    h = jnp.maximum(h, 0.0)        # ReLU in f32 on the VPU
    # fc2 on the MXU, f32 accumulate.
    z = jnp.dot(h.astype(w2_ref.dtype), w2_ref[...],
                preferred_element_type=jnp.float32)
    z = z + b2_ref[...]
    o_ref[...] = jax.nn.sigmoid(z).astype(o_ref.dtype)   # sigmoid on the EUP


def prepare_params(w1, b1, w2, b2, compute_dtype=jnp.float32):
    """One-time padding + casting of the weights (amortized across forwards).

    Zero padding is exact: padded hidden units see zero weights/bias
    (relu(0)=0 and their w2 rows are zero); padded output columns produce
    sigmoid(0)=0.5 but are sliced off in the wrapper. bf16 compute_dtype
    quantizes the matmul operands only (accumulation stays f32).
    """
    in_f, hid = w1.shape
    out_f = w2.shape[1]
    hid_p, out_p = _pad_lane(hid), _pad_lane(out_f)
    cdt = jnp.dtype(compute_dtype)
    f32 = jnp.float32

    w1_p = jnp.zeros((in_f, hid_p), cdt).at[:, :hid].set(w1.astype(cdt))
    b1_p = jnp.zeros((1, hid_p), f32).at[:, :hid].set(
        jnp.asarray(b1, f32).reshape(1, hid))
    w2_p = jnp.zeros((hid_p, out_p), cdt).at[:hid, :out_f].set(w2.astype(cdt))
    b2_p = jnp.zeros((1, out_p), f32).at[:, :out_f].set(
        jnp.asarray(b2, f32).reshape(1, out_f))

    return {"w1": w1_p, "b1": b1_p, "w2": w2_p, "b2": b2_p,
            "in_features": in_f, "hidden_size": hid, "output_size": out_f}


def simple_neural_net(x, params):
    """Forward pass. x: (B, in_features) f32; params from prepare_params()."""
    w1, b1, w2, b2 = params["w1"], params["b1"], params["w2"], params["b2"]
    in_f = params["in_features"]
    hid = params["hidden_size"]
    out_f = params["output_size"]
    B, xin = x.shape
    if xin != in_f or w1.shape[0] != in_f:
        raise ValueError("x feature dim does not match prepared params")
    hid_p, out_p = w1.shape[1], w2.shape[1]

    tile_b, b_p = _pick_batch_tile(B)
    # Only pads batch rows in the multi-tile case when B % tile_b != 0.
    x_in = x if b_p == B else jnp.zeros((b_p, in_f), x.dtype).at[:B].set(x)
    grid = (b_p // tile_b,)

    # VMEM budget: double-buffered x/out tiles, weights counted with the
    # default double-buffering (constant index_map, but budget conservatively),
    # plus the f32 hidden activation.
    w_elt = w1.dtype.itemsize
    x_elt = x.dtype.itemsize
    weight_bytes = 2 * ((in_f * hid_p + hid_p * out_p) * w_elt
                        + (hid_p + out_p) * 4)
    io_bytes = 2 * tile_b * (in_f * x_elt + out_p * 4)
    act_bytes = tile_b * hid_p * 4
    vmem_budget = weight_bytes + io_bytes + act_bytes
    vmem_ceiling = _vmem_ceiling_bytes()
    if weight_bytes > vmem_ceiling // 2:
        # Resident-weights assumption would overflow VMEM (first to break on
        # v7x's 64 MiB). Larger models need a K-reduction grid axis with an
        # f32 accumulator instead of whole-weight residency.
        raise ValueError(
            "Weights too large for the VMEM-resident path on this TPU; "
            "a K-tiled variant is required for this size.")
    vmem_limit = int(min(vmem_ceiling,
                         max(vmem_budget + vmem_budget // 2, 4 * 1024 * 1024)))

    # Scheduler hint from the TRUE (unpadded) problem size.
    cost = pl.CostEstimate(
        flops=2 * B * (in_f * hid + hid * out_f),
        transcendentals=B * out_f,
        bytes_accessed=(B * in_f * x_elt
                        + (in_f * hid + hid * out_f) * w_elt
                        + (hid + out_f) * 4
                        + B * out_f * 4),
    )

    out_padded = pl.pallas_call(
        mlp_kernel,
        out_shape=jax.ShapeDtypeStruct((b_p, out_p), jnp.float32),
        grid=grid,
        in_specs=[
            pl.BlockSpec((tile_b, in_f), lambda i: (i, 0)),   # x: batch-tiled, raw dtype
            pl.BlockSpec((in_f, hid_p), lambda i: (0, 0)),    # w1: VMEM-resident
            pl.BlockSpec((1, hid_p), lambda i: (0, 0)),       # b1: VMEM-resident
            pl.BlockSpec((hid_p, out_p), lambda i: (0, 0)),   # w2: VMEM-resident
            pl.BlockSpec((1, out_p), lambda i: (0, 0)),       # b2: VMEM-resident
        ],
        out_specs=pl.BlockSpec((tile_b, out_p), lambda i: (i, 0)),
        compiler_params=pltpu.CompilerParams(
            dimension_semantics=("parallel",),  # batch tiles split across TCs
            vmem_limit_bytes=vmem_limit,
        ),
        cost_estimate=cost,
    )(x_in, w1, b1, w2, b2)

    return out_padded[:B, :out_f]


def init_params(key, input_size, hidden_size, output_size):
    """Deterministic init mimicking nn.Linear's U(-1/sqrt(fan_in), 1/sqrt(fan_in))."""
    k1, k2, k3, k4 = jax.random.split(key, 4)
    bound1 = 1.0 / (input_size ** 0.5)
    bound2 = 1.0 / (hidden_size ** 0.5)
    w1 = jax.random.uniform(k1, (input_size, hidden_size), jnp.float32, -bound1, bound1)
    b1 = jax.random.uniform(k2, (1, hidden_size), jnp.float32, -bound1, bound1)
    w2 = jax.random.uniform(k3, (hidden_size, output_size), jnp.float32, -bound2, bound2)
    b2 = jax.random.uniform(k4, (1, output_size), jnp.float32, -bound2, bound2)
    return w1, b1, w2, b2


if __name__ == "__main__":
    batch_size, input_size, hidden_size, output_size = 8, 32, 64, 16

    key = jax.random.PRNGKey(0)
    kx, kp = jax.random.split(key)
    x = jax.random.normal(kx, (batch_size, input_size), jnp.float32)
    w1, b1, w2, b2 = init_params(kp, input_size, hidden_size, output_size)

    # Pure-JAX reference.
    ref = jax.nn.sigmoid(jnp.maximum(x @ w1 + b1, 0.0) @ w2 + b2)

    # f32 path (exact w.r.t. reference up to f32 rounding).
    params_f32 = prepare_params(w1, b1, w2, b2, compute_dtype=jnp.float32)
    out_f32 = jax.block_until_ready(simple_neural_net(x, params_f32))
    assert out_f32.shape == (batch_size, output_size)
    assert jnp.allclose(out_f32, ref, atol=1e-5, rtol=1e-5)

    # bf16-operand path (fast path on all generations incl. v5e); looser
    # tolerance from bf16 operand rounding, accumulation stays f32.
    params_bf16 = prepare_params(w1, b1, w2, b2, compute_dtype=jnp.bfloat16)
    out_bf16 = jax.block_until_ready(simple_neural_net(x, params_bf16))
    assert out_bf16.shape == (batch_size, output_size)
    assert jnp.allclose(out_bf16, ref, atol=5e-2, rtol=5e-2)

    print("KERNEL_OK")
</pallas_src>

<mosaic_0001>
module attributes {stable_mosaic.version = 11 : i64} {
  func.func @mlp_kernel(%arg0: i32, %arg1: memref<8x32xf32, #tpu.memory_space<vmem>>, %arg2: memref<32x128xf32, #tpu.memory_space<vmem>>, %arg3: memref<1x128xf32, #tpu.memory_space<vmem>>, %arg4: memref<128x128xf32, #tpu.memory_space<vmem>>, %arg5: memref<1x128xf32, #tpu.memory_space<vmem>>, %arg6: memref<8x128xf32, #tpu.memory_space<vmem>>) attributes {dimension_semantics = [#tpu.dimension_semantics<parallel>], iteration_bounds = array<i64: 1>, scalar_prefetch = 0 : i64, scratch_operands = 0 : i64, tpu.core_type = #tpu.core_type<tc>, window_params = [{transform_indices = @transform_0, window_bounds = array<i64: 8, 32>}, {pipeline_mode = #tpu.pipeline_mode<synchronous>, transform_indices = @transform_1, window_bounds = array<i64: 32, 128>}, {pipeline_mode = #tpu.pipeline_mode<synchronous>, transform_indices = @transform_2, window_bounds = array<i64: 1, 128>}, {pipeline_mode = #tpu.pipeline_mode<synchronous>, transform_indices = @transform_3, window_bounds = array<i64: 128, 128>}, {pipeline_mode = #tpu.pipeline_mode<synchronous>, transform_indices = @transform_4, window_bounds = array<i64: 1, 128>}, {transform_indices = @transform_5, window_bounds = array<i64: 8, 128>}]} {
    %c0 = arith.constant 0 : index
    %c0_0 = arith.constant 0 : index
    %0 = vector.load %arg1[%c0, %c0_0] : memref<8x32xf32, #tpu.memory_space<vmem>>, vector<8x32xf32>
    %c0_1 = arith.constant 0 : index
    %c0_2 = arith.constant 0 : index
    %1 = vector.load %arg2[%c0_1, %c0_2] : memref<32x128xf32, #tpu.memory_space<vmem>>, vector<32x128xf32>
    %cst = arith.constant dense<0.000000e+00> : vector<8x128xf32>
    %2 = tpu.matmul %0, %1, %cst {dimension_numbers = #tpu.dot_dimension_numbers<[1], [0], [0], [1], [0, 0, 1, 1], [], []>} : vector<8x32xf32>, vector<32x128xf32>, vector<8x128xf32> -> vector<8x128xf32>
    %c0_3 = arith.constant 0 : index
    %c0_4 = arith.constant 0 : index
    %3 = vector.load %arg3[%c0_3, %c0_4] : memref<1x128xf32, #tpu.memory_space<vmem>>, vector<1x128xf32>
    %4 = vector.broadcast %3 : vector<1x128xf32> to vector<8x128xf32>
    %5 = arith.addf %2, %4 : vector<8x128xf32>
    %cst_5 = arith.constant 0.000000e+00 : f32
    %6 = vector.broadcast %cst_5 : f32 to vector<8x128xf32>
    %7 = arith.maximumf %5, %6 : vector<8x128xf32>
    %c0_6 = arith.constant 0 : index
    %c0_7 = arith.constant 0 : index
    %8 = vector.load %arg4[%c0_6, %c0_7] : memref<128x128xf32, #tpu.memory_space<vmem>>, vector<128x128xf32>
    %cst_8 = arith.constant dense<0.000000e+00> : vector<8x128xf32>
    %9 = tpu.matmul %7, %8, %cst_8 {dimension_numbers = #tpu.dot_dimension_numbers<[1], [0], [0], [1], [0, 0, 1, 1], [], []>} : vector<8x128xf32>, vector<128x128xf32>, vector<8x128xf32> -> vector<8x128xf32>
    %c0_9 = arith.constant 0 : index
    %c0_10 = arith.constant 0 : index
    %10 = vector.load %arg5[%c0_9, %c0_10] : memref<1x128xf32, #tpu.memory_space<vmem>>, vector<1x128xf32>
    %11 = vector.broadcast %10 : vector<1x128xf32> to vector<8x128xf32>
    %12 = arith.addf %9, %11 : vector<8x128xf32>
    %13 = arith.negf %12 : vector<8x128xf32>
    %14 = math.exp %13 : vector<8x128xf32>
    %cst_11 = arith.constant 1.000000e+00 : f32
    %15 = vector.broadcast %cst_11 : f32 to vector<8x128xf32>
    %16 = arith.addf %15, %14 : vector<8x128xf32>
    %17 = arith.divf %15, %16 : vector<8x128xf32>
    %c0_12 = arith.constant 0 : index
    %c0_13 = arith.constant 0 : index
    %18 = vector.load %arg6[%c0_12, %c0_13] : memref<8x128xf32, #tpu.memory_space<vmem>>, vector<8x128xf32>
    tpu.vector_store %arg6[%c0_12, %c0_13], %17 {strides = array<i32>} : memref<8x128xf32, #tpu.memory_space<vmem>>, vector<8x128xf32>,
    return
  }
  func.func @transform_0(%arg0: i32) -> (i32, i32) {
    %c0_i32 = arith.constant 0 : i32
    %c0_i32_0 = arith.constant 0 : i32
    return %arg0, %c0_i32 : i32, i32
  }
  func.func @transform_1(%arg0: i32) -> (i32, i32) {
    %c0_i32 = arith.constant 0 : i32
    %c0_i32_0 = arith.constant 0 : i32
    %c0_i32_1 = arith.constant 0 : i32
    return %c0_i32, %c0_i32_0 : i32, i32
  }
  func.func @transform_2(%arg0: i32) -> (i32, i32) {
    %c0_i32 = arith.constant 0 : i32
    %c0_i32_0 = arith.constant 0 : i32
    %c0_i32_1 = arith.constant 0 : i32
    return %c0_i32, %c0_i32_0 : i32, i32
  }
  func.func @transform_3(%arg0: i32) -> (i32, i32) {
    %c0_i32 = arith.constant 0 : i32
    %c0_i32_0 = arith.constant 0 : i32
    %c0_i32_1 = arith.constant 0 : i32
    return %c0_i32, %c0_i32_0 : i32, i32
  }
  func.func @transform_4(%arg0: i32) -> (i32, i32) {
    %c0_i32 = arith.constant 0 : i32
    %c0_i32_0 = arith.constant 0 : i32
    %c0_i32_1 = arith.constant 0 : i32
    return %c0_i32, %c0_i32_0 : i32, i32
  }
  func.func @transform_5(%arg0: i32) -> (i32, i32) {
    %c0_i32 = arith.constant 0 : i32
    %c0_i32_0 = arith.constant 0 : i32
    return %arg0, %c0_i32 : i32, i32
  }
}

</mosaic_0001>

<llo_original>
// kernel: tpu_custom_call.1
$region0: #{tpu_custom_call.1}
  #allocation0 [shape = 'u32[]', space=smem, size = 0x4, offset = 0x4, fixed_abs, tag = 'smem constant byte address 0x4 - core index']
  #allocation1 [shape = 'u32[144,128]{1,0:T(1,128)}', space=vmem, size = 0x12000, scoped, tag = 'internal scratch']
  %s0 = inlined_call_operand.hbm [shape: f32[8,32], index: 0, kind: input, shape index: {}]
  %s1 = inlined_call_operand.hbm [shape: f32[32,128], index: 1, kind: input, shape index: {}]
  %s2 = inlined_call_operand.vmem [shape: f32[1,128], index: 2, kind: input, shape index: {}]
  %s3 = inlined_call_operand.hbm [shape: f32[128,128], index: 3, kind: input, shape index: {}]
  %s4 = inlined_call_operand.vmem [shape: f32[1,128], index: 4, kind: input, shape index: {}]
  %s5 = inlined_call_operand.hbm [shape: f32[8,128], index: 5, kind: output, shape index: {}]
  %s6 = sld [smem:[#allocation0]]
  $region42: #{tpu_custom_call.1} parent=0
    _
  %s8 = ssub.s32 1, %s6
  %s9 = scalar_select 0, %s8, %s6
  $region1: #{tpu_custom_call.1} parent=0
    #allocation2 [shape = 'u8[4096]{0}', space=vmem, size = 0x1000, scoped, tag = 'input window, operand 0, single buffered']
    #allocation3 [shape = 's32[1]{0}', space=sflag, size = 0x4, scoped, tag = 'scoped memory for tpu_custom_call.1']
    #allocation4 [shape = 's32[1]{0}', space=sflag, size = 0x4, scoped, tag = 'scoped memory for tpu_custom_call.1']
    #allocation5 [shape = 'u8[16384]{0}', space=vmem, size = 0x4000, scoped, tag = 'input window, operand 1, single buffered']
    #allocation6 [shape = 's32[1]{0}', space=sflag, size = 0x4, scoped, tag = 'scoped memory for tpu_custom_call.1']
    #allocation7 [shape = 'u8[65536]{0}', space=vmem, size = 0x10000, scoped, tag = 'input window, operand 3, single buffered']
    #allocation8 [shape = 'u8[4096]{0}', space=vmem, size = 0x1000, scoped, tag = 'output window, operand 0, single buffered']
    %10 = vsyncpa [#allocation3], 0
    %11 = vsyncpa [#allocation6], 0
    %12 = vsyncpa [#allocation4], 0
    // Predicated region
    $region2: #{tpu_custom_call.1} parent=1 // pred_check
      _
    $region3: #{tpu_custom_call.1} parent=1 // pred_check_branch
      %14 = sbr.rel (0) target = $region5
    $region4: #{tpu_custom_call.1} parent=1 // pred_region
      %s16 = ssub.s32 128, 128
      %17 = vsyncadd [#allocation3], %s16
      %s19 = sshll.u32 [#allocation2], 4
      %s20 = int_to_ptr.vmem [resolvable:$true] %s19
      %22 = dma.hbm_to_vmem [thread:$0]  %s0, 128, %s20, [#allocation3]
    $region5: #{tpu_custom_call.1} parent=1 // pred_fallthru
      _
    // Predicated region
    $region6: #{tpu_custom_call.1} parent=1 // pred_check
      _
    $region7: #{tpu_custom_call.1} parent=1 // pred_check_branch
      %24 = sbr.rel (0) target = $region9
    $region8: #{tpu_custom_call.1} parent=1 // pred_region
      %s26 = ssub.s32 512, 512
      %27 = vsyncadd [#allocation6], %s26
      %s28 = sshll.u32 [#allocation5], 4
      %s29 = int_to_ptr.vmem [resolvable:$true] %s28
      %34 = dma.hbm_to_vmem [thread:$0]  %s1, 512, %s29, [#allocation6], 128, 128, 8
    $region9: #{tpu_custom_call.1} parent=1 // pred_fallthru
      _
    // Predicated region
    $region10: #{tpu_custom_call.1} parent=1 // pred_check
      _
    $region11: #{tpu_custom_call.1} parent=1 // pred_check_branch
      %36 = sbr.rel (0) target = $region13
    $region12: #{tpu_custom_call.1} parent=1 // pred_region
      _
    $region13: #{tpu_custom_call.1} parent=1 // pred_fallthru
      _
    // Predicated region
    $region14: #{tpu_custom_call.1} parent=1 // pred_check
      _
    $region15: #{tpu_custom_call.1} parent=1 // pred_check_branch
      %38 = sbr.rel (0) target = $region17
    $region16: #{tpu_custom_call.1} parent=1 // pred_region
      %s40 = ssub.s32 2048, 2048
      %41 = vsyncadd [#allocation6], %s40
      %s42 = sshll.u32 [#allocation7], 4
      %s43 = int_to_ptr.vmem [resolvable:$true] %s42
      %48 = dma.hbm_to_vmem [thread:$0]  %s3, 2048, %s43, [#allocation6], 128, 128, 8
    $region17: #{tpu_custom_call.1} parent=1 // pred_fallthru
      _
    // Predicated region
    $region18: #{tpu_custom_call.1} parent=1 // pred_check
      _
    $region19: #{tpu_custom_call.1} parent=1 // pred_check_branch
      %50 = sbr.rel (0) target = $region21
    $region20: #{tpu_custom_call.1} parent=1 // pred_region
      _
    $region21: #{tpu_custom_call.1} parent=1 // pred_fallthru
      _
    // Predicated region
    $region22: #{tpu_custom_call.1} parent=1 // pred_check
      _
    $region23: #{tpu_custom_call.1} parent=1 // pred_check_branch
      %52 = sbr.rel (0) target = $region25
    $region24: #{tpu_custom_call.1} parent=1 // pred_region
      %53 = dma.done [#allocation3], 128
    $region25: #{tpu_custom_call.1} parent=1 // pred_fallthru
      _
    // Predicated region
    $region26: #{tpu_custom_call.1} parent=1 // pred_check
      _
    $region27: #{tpu_custom_call.1} parent=1 // pred_check_branch
      %55 = sbr.rel (0) target = $region29
    $region28: #{tpu_custom_call.1} parent=1 // pred_region
      %56 = dma.done [#allocation6], 512
    $region29: #{tpu_custom_call.1} parent=1 // pred_fallthru
      _
    // Predicated region
    $region30: #{tpu_custom_call.1} parent=1 // pred_check
      _
    $region31: #{tpu_custom_call.1} parent=1 // pred_check_branch
      %58 = sbr.rel (0) target = $region33
    $region32: #{tpu_custom_call.1} parent=1 // pred_region
      %59 = dma.done [#allocation6], 2048
    $region33: #{tpu_custom_call.1} parent=1 // pred_fallthru
      _
    %v60 = vld [vmem:[#allocation2] sm:$0xff]
    %v61 = vld [vmem:[#allocation5] sm:$0xff]
    %v62 = vld [vmem:[#allocation5 + $0x8] sm:$0xff]
    %v63 = vld [vmem:[#allocation5 + $0x10] sm:$0xff]
    %v64 = vld [vmem:[#allocation5 + $0x18] sm:$0xff]
    %v65 = vld [vmem:[%s2] sm:$0x1]
    %v67 = vlaneseq
    %v68 = vshrl.u32 %v67, 7
    %v69 = vsub.s32 0, %v68
    %v70 = vrot.slane %v65, %v69
    %vm72 = vcmask 261120
    %v74 = vsel %vm72, %v60, 0
    %76 = vmatprep.subr.mxu0 0.0
    %77 = vmatpush1.msra.mxu0 0.0
    %78 = vmatprep.subr.mxu0 0.0
    %79 = vmatpush1.msra.mxu0 0.0
    %80 = vmatprep.subr.mxu0 0.0
    %81 = vmatpush1.msra.mxu0 0.0
    %82 = vmatprep.subr.mxu0 0.0
    %83 = vmatpush1.msra.mxu0 0.0
    %84 = vmatprep.subr.mxu0 0.0
    %85 = vmatpush1.msra.mxu0 0.0
    %86 = vmatprep.subr.mxu0 0.0
    %87 = vmatpush1.msra.mxu0 0.0
    %88 = vmatprep.subr.mxu0 0.0
    %89 = vmatpush1.msra.mxu0 0.0
    %90 = vmatprep.subr.mxu0 0.0
    %91 = vmatpush1.msra.mxu0 0.0
    %92 = vmatprep.subr.mxu0 0.0
    %93 = vmatpush1.msra.mxu0 0.0
    %94 = vmatprep.subr.mxu0 0.0
    %95 = vmatpush1.msra.mxu0 0.0
    %96 = vmatprep.subr.mxu0 0.0
    %97 = vmatpush1.msra.mxu0 0.0
    %98 = vmatprep.subr.mxu0 0.0
    %99 = vmatpush1.msra.mxu0 0.0
    %100 = vmatprep.subr.mxu0 0.0
    %101 = vmatpush1.msra.mxu0 %v64
    %102 = vmatprep.subr.mxu0 0.0
    %103 = vmatpush1.msra.mxu0 %v63
    %104 = vmatprep.subr.mxu0 0.0
    %105 = vmatpush1.msra.mxu0 %v62
    %106 = vmatprep.subr.mxu0 0.0
    %107 = vmatpush1.msra.mxu0 %v61
    %108 = vmatprep.subr.mxu0 0.0
    %109 = vmatpush2.msra.mxu0 0.0
    %110 = vmatprep.subr.mxu0 0.0
    %111 = vmatpush2.msra.mxu0 0.0
    %112 = vmatprep.subr.mxu0 0.0
    %113 = vmatpush2.msra.mxu0 0.0
    %114 = vmatprep.subr.mxu0 0.0
    %115 = vmatpush2.msra.mxu0 0.0
    %116 = vmatprep.subr.mxu0 0.0
    %117 = vmatpush2.msra.mxu0 0.0
    %118 = vmatprep.subr.mxu0 0.0
    %119 = vmatpush2.msra.mxu0 0.0
    %120 = vmatprep.subr.mxu0 0.0
    %121 = vmatpush2.msra.mxu0 0.0
    %122 = vmatprep.subr.mxu0 0.0
    %123 = vmatpush2.msra.mxu0 0.0
    %124 = vmatprep.subr.mxu0 0.0
    %125 = vmatpush2.msra.mxu0 0.0
    %126 = vmatprep.subr.mxu0 0.0
    %127 = vmatpush2.msra.mxu0 0.0
    %128 = vmatprep.subr.mxu0 0.0
    %129 = vmatpush2.msra.mxu0 0.0
    %130 = vmatprep.subr.mxu0 0.0
    %131 = vmatpush2.msra.mxu0 0.0
    %132 = vmatprep.subr.mxu0 0.0
    %133 = vmatpush2.msra.mxu0 0.0
    %134 = vmatprep.subr.mxu0 0.0
    %135 = vmatpush2.msra.mxu0 0.0
    %136 = vmatprep.subr.mxu0 0.0
    %137 = vmatpush2.msra.mxu0 0.0
    %138 = vmatprep.subr.mxu0 0.0
    %139 = vmatpush2.msra.mxu0 0.0
    %140 = vmatprep.mubr.f32.mxu0 0.0
    %141 = vmatmul.mubr.f32.gmra.mxu0 %v74
    %v142 = vpop.f32.mrf.mxu0
    %v143 = vadd.f32 %v70, %v142
    %v144 = vpop.f32.mrf.mxu0
    %145 = vdwg.mxu0
    %v146 = vmax.f32 %v143, 0.0
    %v147 = vld [vmem:[#allocation7] sm:$0xff]
    %v148 = vld [vmem:[#allocation7 + $0x8] sm:$0xff]
    %v149 = vld [vmem:[#allocation7 + $0x10] sm:$0xff]
    %v150 = vld [vmem:[#allocation7 + $0x18] sm:$0xff]
    %v151 = vld [vmem:[#allocation7 + $0x20] sm:$0xff]
    %v152 = vld [vmem:[#allocation7 + $0x28] sm:$0xff]
    %v153 = vld [vmem:[#allocation7 + $0x30] sm:$0xff]
    %v154 = vld [vmem:[#allocation7 + $0x38] sm:$0xff]
    %v155 = vld [vmem:[#allocation7 + $0x40] sm:$0xff]
    %v156 = vld [vmem:[#allocation7 + $0x48] sm:$0xff]
    %v157 = vld [vmem:[#allocation7 + $0x50] sm:$0xff]
    %v158 = vld [vmem:[#allocation7 + $0x58] sm:$0xff]
    %v159 = vld [vmem:[#allocation7 + $0x60] sm:$0xff]
    %v160 = vld [vmem:[#allocation7 + $0x68] sm:$0xff]
    %v161 = vld [vmem:[#allocation7 + $0x70] sm:$0xff]
    %v162 = vld [vmem:[#allocation7 + $0x78] sm:$0xff]
    %v163 = vld [vmem:[%s4] sm:$0x1]
    %v165 = vlaneseq
    %v166 = vshrl.u32 %v165, 7
    %v167 = vsub.s32 0, %v166
    %v168 = vrot.slane %v163, %v167
    %170 = vmatprep.subr.mxu0 0.0
    %171 = vmatpush1.msra.mxu0 %v162
    %172 = vmatprep.subr.mxu0 0.0
    %173 = vmatpush1.msra.mxu0 %v161
    %174 = vmatprep.subr.mxu0 0.0
    %175 = vmatpush1.msra.mxu0 %v160
    %176 = vmatprep.subr.mxu0 0.0
    %177 = vmatpush1.msra.mxu0 %v159
    %178 = vmatprep.subr.mxu0 0.0
    %179 = vmatpush1.msra.mxu0 %v158
    %180 = vmatprep.subr.mxu0 0.0
    %181 = vmatpush1.msra.mxu0 %v157
    %182 = vmatprep.subr.mxu0 0.0
    %183 = vmatpush1.msra.mxu0 %v156
    %184 = vmatprep.subr.mxu0 0.0
    %185 = vmatpush1.msra.mxu0 %v155
    %186 = vmatprep.subr.mxu0 0.0
    %187 = vmatpush1.msra.mxu0 %v154
    %188 = vmatprep.subr.mxu0 0.0
    %189 = vmatpush1.msra.mxu0 %v153
    %190 = vmatprep.subr.mxu0 0.0
    %191 = vmatpush1.msra.mxu0 %v152
    %192 = vmatprep.subr.mxu0 0.0
    %193 = vmatpush1.msra.mxu0 %v151
    %194 = vmatprep.subr.mxu0 0.0
    %195 = vmatpush1.msra.mxu0 %v150
    %196 = vmatprep.subr.mxu0 0.0
    %197 = vmatpush1.msra.mxu0 %v149
    %198 = vmatprep.subr.mxu0 0.0
    %199 = vmatpush1.msra.mxu0 %v148
    %200 = vmatprep.subr.mxu0 0.0
    %201 = vmatpush1.msra.mxu0 %v147
    %202 = vmatprep.subr.mxu0 0.0
    %203 = vmatpush2.msra.mxu0 0.0
    %204 = vmatprep.subr.mxu0 0.0
    %205 = vmatpush2.msra.mxu0 0.0
    %206 = vmatprep.subr.mxu0 0.0
    %207 = vmatpush2.msra.mxu0 0.0
    %208 = vmatprep.subr.mxu0 0.0
    %209 = vmatpush2.msra.mxu0 0.0
    %210 = vmatprep.subr.mxu0 0.0
    %211 = vmatpush2.msra.mxu0 0.0
    %212 = vmatprep.subr.mxu0 0.0
    %213 = vmatpush2.msra.mxu0 0.0
    %214 = vmatprep.subr.mxu0 0.0
    %215 = vmatpush2.msra.mxu0 0.0
    %216 = vmatprep.subr.mxu0 0.0
    %217 = vmatpush2.msra.mxu0 0.0
    %218 = vmatprep.subr.mxu0 0.0
    %219 = vmatpush2.msra.mxu0 0.0
    %220 = vmatprep.subr.mxu0 0.0
    %221 = vmatpush2.msra.mxu0 0.0
    %222 = vmatprep.subr.mxu0 0.0
    %223 = vmatpush2.msra.mxu0 0.0
    %224 = vmatprep.subr.mxu0 0.0
    %225 = vmatpush2.msra.mxu0 0.0
    %226 = vmatprep.subr.mxu0 0.0
    %227 = vmatpush2.msra.mxu0 0.0
    %228 = vmatprep.subr.mxu0 0.0
    %229 = vmatpush2.msra.mxu0 0.0
    %230 = vmatprep.subr.mxu0 0.0
    %231 = vmatpush2.msra.mxu0 0.0
    %232 = vmatprep.subr.mxu0 0.0
    %233 = vmatpush2.msra.mxu0 0.0
    %234 = vmatprep.mubr.f32.mxu0 0.0
    %235 = vmatmul.mubr.f32.gmra.mxu0 %v146
    %v236 = vpop.f32.mrf.mxu0
    %v237 = vadd.f32 %v168, %v236
    %v238 = vpop.f32.mrf.mxu0
    %239 = vdwg.mxu0
    %v240 = vxor.u32 %v237, 2147483648
    %v241 = vmul.f32 %v240, 1.442695
    %v242 = vpow.pop %v241
    %v243 = vadd.f32 %v242, 1.0
    %v244 = vrcp.pop %v243
    %v245 = vmul.f32 1.0, %v244
    %246 = vst [vmem:[#allocation8] sm:$0xff] %v245
    // Predicated region
    $region34: #{tpu_custom_call.1} parent=1 // pred_check
      _
    $region35: #{tpu_custom_call.1} parent=1 // pred_check_branch
      %248 = sbr.rel (0) target = $region37
    $region36: #{tpu_custom_call.1} parent=1 // pred_region
      %s250 = ssub.s32 128, 128
      %251 = vsyncadd [#allocation4], %s250
      %s253 = sshll.u32 [#allocation8], 4
      %s254 = int_to_ptr.vmem [resolvable:$true] %s253
      %256 = dma.vmem_to_hbm [thread:$0]  %s254, 128, %s5, [#allocation4]
    $region37: #{tpu_custom_call.1} parent=1 // pred_fallthru
      _
    // Predicated region
    $region38: #{tpu_custom_call.1} parent=1 // pred_check
      _
    $region39: #{tpu_custom_call.1} parent=1 // pred_check_branch
      %258 = sbr.rel (0) target = $region41
    $region40: #{tpu_custom_call.1} parent=1 // pred_region
      %259 = dma.done [#allocation4], 128
    $region41: #{tpu_custom_call.1} parent=1 // pred_fallthru
      _
    %260 = vsyncpa [#allocation3], 1
    %261 = vsyncpa [#allocation6], 1
    %262 = vsyncpa [#allocation4], 1

</llo_original>
